<compile_context>
chip_gen: v5e
topology: v5e:2x2
jax: 0.10.0
libtpu: 0.0.40
codegen_flags: <defaults>
</compile_context>

<pallas_src>
import functools
import math

import jax
import jax.numpy as jnp
from jax.experimental import pallas as pl
from jax.experimental.pallas import tpu as pltpu

_INV_SQRT2 = 1.0 / math.sqrt(2.0)


def _round_up(x, m):
    return ((x + m - 1) // m) * m


def _vmem_budget_bytes():
    """~75% of the chip's physical VMEM (64 MiB fallback -> 48 MiB, safe on all gens)."""
    cap = 64 * 1024 * 1024
    try:
        info = pltpu.get_tpu_info()
        cap = int(getattr(info, "vmem_capacity_bytes", cap) or cap)
    except Exception:
        pass
    return max(32 * 1024 * 1024, int(cap * 0.75))


def _pick_tk(hid_p, target):
    """Largest multiple of 128 <= target that divides hid_p (hid_p is a multiple of 128)."""
    tk = max(128, (min(target, hid_p) // 128) * 128)
    while hid_p % tk != 0:
        tk -= 128
    return tk


def _choose_tiles(M, in_p, hid_p, out_p, compute_dtype, out_dtype,
                  tm_target, tk_target, vmem_budget):
    cbytes = jnp.dtype(compute_dtype).itemsize
    obytes = jnp.dtype(out_dtype).itemsize
    sublane = 8 * (4 // max(1, cbytes))     # 8 for f32, 16 for bf16

    tm = _round_up(min(tm_target, _round_up(M, sublane)), sublane)
    # Megacore (v7x has 2 TensorCores): prefer >= 2 token tiles when M allows it.
    if M > sublane and _round_up(M, tm) // tm < 2:
        tm = max(sublane, _round_up((M + 1) // 2, sublane))
    tk = _pick_tk(hid_p, tk_target)

    def footprint(tm_, tk_):
        return (2 * tm_ * in_p * cbytes        # x tile (double-buffered)
                + 2 * in_p * tk_ * cbytes      # W1 hidden slice
                + 2 * hid_p * 4                # b1 (resident, f32)
                + 2 * tk_ * out_p * cbytes     # W2 hidden slice
                + 2 * out_p * 4                # b2
                + 2 * tm_ * out_p * obytes     # output tile
                + tm_ * out_p * 4)             # f32 accumulator scratch

    while footprint(tm, tk) > vmem_budget and tk > 128:
        tk = _pick_tk(hid_p, max(128, tk // 2))
    while footprint(tm, tk) > vmem_budget and tm > sublane:
        tm = max(sublane, _round_up(tm // 2, sublane))
    return tm, tk


def mlp_kernel(x_ref, w1_ref, b1_ref, w2_ref, b2_ref, o_ref, acc_ref, *, tk):
    k = pl.program_id(1)

    @pl.when(k == 0)
    def _init():
        acc_ref[...] = jnp.zeros_like(acc_ref)

    # fc1 for this hidden slice: f32 accumulation on the MXU.
    h = jnp.dot(x_ref[...], w1_ref[...], preferred_element_type=jnp.float32)
    off = pl.multiple_of(k * tk, tk)
    h = h + b1_ref[:, pl.ds(off, tk)]                       # b1 is VMEM-resident (f32)
    # Exact GELU (erf formulation == torch.nn.GELU default), kept in f32.
    h = 0.5 * h * (1.0 + jax.lax.erf(h * _INV_SQRT2))
    # dropout(p=0.0) is identity — nothing to do.
    # fc2 partial product for this hidden slice, accumulated in f32.
    acc_ref[...] += jnp.dot(h.astype(w2_ref.dtype), w2_ref[...],
                            preferred_element_type=jnp.float32)

    @pl.when(k == pl.num_programs(1) - 1)
    def _finalize():
        o_ref[...] = (acc_ref[...] + b2_ref[...]).astype(o_ref.dtype)


def mlp_pallas(x, w1, b1, w2, b2, *, tm, tk, out_dtype, vmem_limit):
    # x: (M_p, in_p) compute_dtype; w1: (in_p, hid_p); b1: (1, hid_p) f32;
    # w2: (hid_p, out_p); b2: (1, out_p) f32.
    M_p, in_p = x.shape
    hid_p = w1.shape[1]
    out_p = w2.shape[1]
    assert M_p % tm == 0 and hid_p % tk == 0
    grid = (M_p // tm, hid_p // tk)

    cbytes = jnp.dtype(x.dtype).itemsize
    obytes = jnp.dtype(out_dtype).itemsize
    n_i = grid[0]
    cost = pl.CostEstimate(
        flops=2 * M_p * (in_p * hid_p + hid_p * out_p),
        transcendentals=M_p * hid_p,
        bytes_accessed=int(x.size * cbytes
                           + n_i * (w1.size + w2.size) * cbytes   # weights re-streamed per i tile
                           + (b1.size + b2.size) * 4
                           + M_p * out_p * obytes),
    )

    return pl.pallas_call(
        functools.partial(mlp_kernel, tk=tk),
        out_shape=jax.ShapeDtypeStruct((M_p, out_p), out_dtype),
        grid_spec=pltpu.PrefetchScalarGridSpec(
            num_scalar_prefetch=0,
            grid=grid,
            in_specs=[
                pl.BlockSpec((tm, in_p), lambda i, k: (i, 0)),    # x tile (k-invariant)
                pl.BlockSpec((in_p, tk), lambda i, k: (0, k)),    # W1 hidden slice
                pl.BlockSpec((1, hid_p), lambda i, k: (0, 0)),    # b1 fully resident
                pl.BlockSpec((tk, out_p), lambda i, k: (k, 0)),   # W2 hidden slice
                pl.BlockSpec((1, out_p), lambda i, k: (0, 0)),    # b2 resident
            ],
            out_specs=pl.BlockSpec((tm, out_p), lambda i, k: (i, 0)),
            scratch_shapes=[pltpu.VMEM((tm, out_p), jnp.float32)],
        ),
        compiler_params=pltpu.CompilerParams(
            dimension_semantics=("parallel", "arbitrary"),
            vmem_limit_bytes=int(vmem_limit),
        ),
        cost_estimate=cost,
    )(x, w1, b1, w2, b2)


def prepare_mlp_params(w1, b1, w2, b2, *, compute_dtype=jnp.bfloat16):
    """Pad (lane multiples of 128) and cast the STATIC parameters once.
    w1: (in, hid) pre-transposed, b1: (hid,), w2: (hid, out) pre-transposed, b2: (out,)."""
    in_f, hid = w1.shape
    out_f = w2.shape[1]
    in_p, hid_p, out_p = (_round_up(d, 128) for d in (in_f, hid, out_f))
    return dict(
        w1=jnp.pad(w1, ((0, in_p - in_f), (0, hid_p - hid))).astype(compute_dtype),
        b1=jnp.pad(b1.reshape(1, -1).astype(jnp.float32), ((0, 0), (0, hid_p - hid))),
        w2=jnp.pad(w2, ((0, hid_p - hid), (0, out_p - out_f))).astype(compute_dtype),
        b2=jnp.pad(b2.reshape(1, -1).astype(jnp.float32), ((0, 0), (0, out_p - out_f))),
        in_features=in_f, hidden_features=hid, out_features=out_f,
        compute_dtype=compute_dtype,
    )


def mlp_forward(x, params, *, tm=512, tk=1024):
    """x: (..., in_features). `params` comes from prepare_mlp_params (padded/cast once)."""
    lead = x.shape[:-1]
    in_f = params["in_features"]
    out_f = params["out_features"]
    assert x.shape[-1] == in_f
    compute_dtype = params["compute_dtype"]
    out_dtype = x.dtype

    x2d = x.reshape(-1, in_f)
    M = x2d.shape[0]
    in_p = params["w1"].shape[0]
    hid_p = params["w1"].shape[1]
    out_p = params["w2"].shape[1]

    vmem_budget = _vmem_budget_bytes()
    tm, tk = _choose_tiles(M, in_p, hid_p, out_p, compute_dtype, out_dtype,
                           tm, tk, vmem_budget)

    M_p = _round_up(M, tm)
    x_p = jnp.pad(x2d, ((0, M_p - M), (0, in_p - in_f))).astype(compute_dtype)

    y_p = mlp_pallas(x_p, params["w1"], params["b1"], params["w2"], params["b2"],
                     tm=tm, tk=tk, out_dtype=out_dtype, vmem_limit=vmem_budget)
    return y_p[:M, :out_f].reshape(*lead, out_f)


if __name__ == "__main__":
    # Small shapes consistent with a transformer-style MLP call: (batch, seq, in_features)
    batch, seq, in_features = 2, 8, 32
    hidden_features = 64
    out_features = 32

    key = jax.random.PRNGKey(0)
    kx, kw1, kb1, kw2, kb2 = jax.random.split(key, 5)

    x = jax.random.normal(kx, (batch, seq, in_features), dtype=jnp.float32)

    # Deterministic parameter init (uniform like nn.Linear defaults), stored pre-transposed.
    lim1 = 1.0 / math.sqrt(in_features)
    lim2 = 1.0 / math.sqrt(hidden_features)
    w1 = jax.random.uniform(kw1, (in_features, hidden_features), jnp.float32, -lim1, lim1)
    b1 = jax.random.uniform(kb1, (hidden_features,), jnp.float32, -lim1, lim1)
    w2 = jax.random.uniform(kw2, (hidden_features, out_features), jnp.float32, -lim2, lim2)
    b2 = jax.random.uniform(kb2, (out_features,), jnp.float32, -lim2, lim2)

    # Pure-JAX reference (exact erf GELU, f32) == torch MLP forward.
    def ref(x2d):
        h = x2d @ w1 + b1
        h = 0.5 * h * (1.0 + jax.lax.erf(h * _INV_SQRT2))
        return h @ w2 + b2

    y_ref = ref(x.reshape(-1, in_features)).reshape(batch, seq, out_features)

    # f32 compute path: bit-tight check against the reference.
    params_f32 = prepare_mlp_params(w1, b1, w2, b2, compute_dtype=jnp.float32)
    y_f32 = jax.block_until_ready(mlp_forward(x, params_f32))
    assert jnp.allclose(y_f32, y_ref, atol=1e-5, rtol=1e-5)

    # bf16 MXU path (perf default on v5e/v6e/v7x): f32 accumulation, mixed-precision tolerance.
    params_bf16 = prepare_mlp_params(w1, b1, w2, b2, compute_dtype=jnp.bfloat16)
    y_bf16 = jax.block_until_ready(mlp_forward(x, params_bf16))
    assert jnp.allclose(y_bf16, y_ref, atol=5e-2, rtol=5e-2)

    print("KERNEL_OK")
</pallas_src>

<mosaic_0001>
module attributes {stable_mosaic.version = 11 : i64} {
  func.func @mlp_kernel(%arg0: i32, %arg1: i32, %arg2: memref<8x128xf32, #tpu.memory_space<vmem>>, %arg3: memref<128x128xf32, #tpu.memory_space<vmem>>, %arg4: memref<1x128xf32, #tpu.memory_space<vmem>>, %arg5: memref<128x128xf32, #tpu.memory_space<vmem>>, %arg6: memref<1x128xf32, #tpu.memory_space<vmem>>, %arg7: memref<8x128xf32, #tpu.memory_space<vmem>>, %arg8: memref<8x128xf32, #tpu.memory_space<vmem>>) attributes {dimension_semantics = [#tpu.dimension_semantics<parallel>, #tpu.dimension_semantics<arbitrary>], iteration_bounds = array<i64: 2, 1>, scalar_prefetch = 0 : i64, scratch_operands = 1 : i64, tpu.core_type = #tpu.core_type<tc>, window_params = [{transform_indices = @transform_0, window_bounds = array<i64: 8, 128>}, {transform_indices = @transform_1, window_bounds = array<i64: 128, 128>}, {pipeline_mode = #tpu.pipeline_mode<synchronous>, transform_indices = @transform_2, window_bounds = array<i64: 1, 128>}, {transform_indices = @transform_3, window_bounds = array<i64: 128, 128>}, {pipeline_mode = #tpu.pipeline_mode<synchronous>, transform_indices = @transform_4, window_bounds = array<i64: 1, 128>}, {transform_indices = @transform_5, window_bounds = array<i64: 8, 128>}]} {
    %c0_i32 = arith.constant 0 : i32
    %0 = arith.cmpi eq, %arg1, %c0_i32 : i32
    %1 = arith.extui %0 : i1 to i32
    %c0_i32_0 = arith.constant 0 : i32
    %2 = arith.cmpi ne, %1, %c0_i32_0 : i32
    scf.if %2 {
      %cst_17 = arith.constant 0.000000e+00 : f32
      %28 = vector.broadcast %cst_17 : f32 to vector<8x128xf32>
      %c0_18 = arith.constant 0 : index
      %c0_19 = arith.constant 0 : index
      %29 = vector.load %arg8[%c0_18, %c0_19] : memref<8x128xf32, #tpu.memory_space<vmem>>, vector<8x128xf32>
      tpu.vector_store %arg8[%c0_18, %c0_19], %28 {strides = array<i32>} : memref<8x128xf32, #tpu.memory_space<vmem>>, vector<8x128xf32>,
    } else {
    }
    %c0 = arith.constant 0 : index
    %c0_1 = arith.constant 0 : index
    %3 = vector.load %arg2[%c0, %c0_1] : memref<8x128xf32, #tpu.memory_space<vmem>>, vector<8x128xf32>
    %c0_2 = arith.constant 0 : index
    %c0_3 = arith.constant 0 : index
    %4 = vector.load %arg3[%c0_2, %c0_3] : memref<128x128xf32, #tpu.memory_space<vmem>>, vector<128x128xf32>
    %cst = arith.constant dense<0.000000e+00> : vector<8x128xf32>
    %5 = tpu.matmul %3, %4, %cst {dimension_numbers = #tpu.dot_dimension_numbers<[1], [0], [0], [1], [0, 0, 1, 1], [], []>} : vector<8x128xf32>, vector<128x128xf32>, vector<8x128xf32> -> vector<8x128xf32>
    %c128_i32 = arith.constant 128 : i32
    %6 = arith.muli %arg1, %c128_i32 : i32
    %7 = tpu.assume_multiple %6, 128 : i32
    %c0_4 = arith.constant 0 : index
    %8 = arith.index_cast %7 : i32 to index
    %9 = vector.load %arg4[%c0_4, %8] : memref<1x128xf32, #tpu.memory_space<vmem>>, vector<1x128xf32>
    %10 = vector.broadcast %9 : vector<1x128xf32> to vector<8x128xf32>
    %11 = arith.addf %5, %10 : vector<8x128xf32>
    %cst_5 = arith.constant 5.000000e-01 : f32
    %12 = vector.broadcast %cst_5 : f32 to vector<8x128xf32>
    %13 = arith.mulf %12, %11 : vector<8x128xf32>
    %cst_6 = arith.constant 0.707106769 : f32
    %14 = vector.broadcast %cst_6 : f32 to vector<8x128xf32>
    %15 = arith.mulf %11, %14 : vector<8x128xf32>
    %16 = math.erf %15 : vector<8x128xf32>
    %cst_7 = arith.constant 1.000000e+00 : f32
    %17 = vector.broadcast %cst_7 : f32 to vector<8x128xf32>
    %18 = arith.addf %17, %16 : vector<8x128xf32>
    %19 = arith.mulf %13, %18 : vector<8x128xf32>
    %c0_8 = arith.constant 0 : index
    %c0_9 = arith.constant 0 : index
    %20 = vector.load %arg8[%c0_8, %c0_9] : memref<8x128xf32, #tpu.memory_space<vmem>>, vector<8x128xf32>
    %c0_10 = arith.constant 0 : index
    %c0_11 = arith.constant 0 : index
    %21 = vector.load %arg5[%c0_10, %c0_11] : memref<128x128xf32, #tpu.memory_space<vmem>>, vector<128x128xf32>
    %cst_12 = arith.constant dense<0.000000e+00> : vector<8x128xf32>
    %22 = tpu.matmul %19, %21, %cst_12 {dimension_numbers = #tpu.dot_dimension_numbers<[1], [0], [0], [1], [0, 0, 1, 1], [], []>} : vector<8x128xf32>, vector<128x128xf32>, vector<8x128xf32> -> vector<8x128xf32>
    %23 = arith.addf %20, %22 : vector<8x128xf32>
    %c0_13 = arith.constant 0 : index
    %c0_14 = arith.constant 0 : index
    %24 = vector.load %arg8[%c0_13, %c0_14] : memref<8x128xf32, #tpu.memory_space<vmem>>, vector<8x128xf32>
    tpu.vector_store %arg8[%c0_13, %c0_14], %23 {strides = array<i32>} : memref<8x128xf32, #tpu.memory_space<vmem>>, vector<8x128xf32>,
    %c0_i32_15 = arith.constant 0 : i32
    %25 = arith.cmpi eq, %arg1, %c0_i32_15 : i32
    %26 = arith.extui %25 : i1 to i32
    %c0_i32_16 = arith.constant 0 : i32
    %27 = arith.cmpi ne, %26, %c0_i32_16 : i32
    scf.if %27 {
      %c0_17 = arith.constant 0 : index
      %c0_18 = arith.constant 0 : index
      %28 = vector.load %arg8[%c0_17, %c0_18] : memref<8x128xf32, #tpu.memory_space<vmem>>, vector<8x128xf32>
      %c0_19 = arith.constant 0 : index
      %c0_20 = arith.constant 0 : index
      %29 = vector.load %arg6[%c0_19, %c0_20] : memref<1x128xf32, #tpu.memory_space<vmem>>, vector<1x128xf32>
      %30 = vector.broadcast %29 : vector<1x128xf32> to vector<8x128xf32>
      %31 = arith.addf %28, %30 : vector<8x128xf32>
      %c0_21 = arith.constant 0 : index
      %c0_22 = arith.constant 0 : index
      %32 = vector.load %arg7[%c0_21, %c0_22] : memref<8x128xf32, #tpu.memory_space<vmem>>, vector<8x128xf32>
      tpu.vector_store %arg7[%c0_21, %c0_22], %31 {strides = array<i32>} : memref<8x128xf32, #tpu.memory_space<vmem>>, vector<8x128xf32>,
    } else {
    }
    return
  }
  func.func @transform_0(%arg0: i32, %arg1: i32) -> (i32, i32) {
    %c0_i32 = arith.constant 0 : i32
    %c0_i32_0 = arith.constant 0 : i32
    return %arg0, %c0_i32 : i32, i32
  }
  func.func @transform_1(%arg0: i32, %arg1: i32) -> (i32, i32) {
    %c0_i32 = arith.constant 0 : i32
    %c0_i32_0 = arith.constant 0 : i32
    return %c0_i32, %arg1 : i32, i32
  }
  func.func @transform_2(%arg0: i32, %arg1: i32) -> (i32, i32) {
    %c0_i32 = arith.constant 0 : i32
    %c0_i32_0 = arith.constant 0 : i32
    %c0_i32_1 = arith.constant 0 : i32
    return %c0_i32, %c0_i32_0 : i32, i32
  }
  func.func @transform_3(%arg0: i32, %arg1: i32) -> (i32, i32) {
    %c0_i32 = arith.constant 0 : i32
    %c0_i32_0 = arith.constant 0 : i32
    return %arg1, %c0_i32 : i32, i32
  }
  func.func @transform_4(%arg0: i32, %arg1: i32) -> (i32, i32) {
    %c0_i32 = arith.constant 0 : i32
    %c0_i32_0 = arith.constant 0 : i32
    %c0_i32_1 = arith.constant 0 : i32
    return %c0_i32, %c0_i32_0 : i32, i32
  }
  func.func @transform_5(%arg0: i32, %arg1: i32) -> (i32, i32) {
    %c0_i32 = arith.constant 0 : i32
    %c0_i32_0 = arith.constant 0 : i32
    return %arg0, %c0_i32 : i32, i32
  }
}

</mosaic_0001>

<llo_original>
// kernel: tpu_custom_call.1
$region0: #{tpu_custom_call.1}
  #allocation0 [shape = 'u32[]', space=smem, size = 0x4, offset = 0x4, fixed_abs, tag = 'smem constant byte address 0x4 - core index']
  #allocation1 [shape = 'u32[72,128]{1,0:T(1,128)}', space=vmem, size = 0x9000, scoped, tag = 'internal scratch']
  #allocation2 [shape = 'f32[8,128]{1,0:T(8,128)}', space=vmem, size = 0x1000, scoped, tag = 'scratch operand']
  %s0 = inlined_call_operand.hbm [shape: f32[16,128], index: 0, kind: input, shape index: {}]
  %s1 = inlined_call_operand.hbm [shape: f32[128,128], index: 1, kind: input, shape index: {}]
  %s2 = inlined_call_operand.vmem [shape: f32[1,128], index: 2, kind: input, shape index: {}]
  %s3 = inlined_call_operand.hbm [shape: f32[128,128], index: 3, kind: input, shape index: {}]
  %s4 = inlined_call_operand.vmem [shape: f32[1,128], index: 4, kind: input, shape index: {}]
  %s5 = inlined_call_operand.hbm [shape: f32[16,128], index: 5, kind: output, shape index: {}]
  %s6 = sld [smem:[#allocation0]]
  $region73: #{tpu_custom_call.1} parent=0
    _
  %s8 = ssub.s32 1, %s6
  %s9 = scalar_select 0, %s8, %s6
  $region1: #{tpu_custom_call.1} parent=0
    #allocation3 [shape = 'u8[8192]{0}', space=vmem, size = 0x2000, scoped, tag = 'input window, operand 0']
    #allocation4 [shape = 's32[2]{0}', space=sflag, size = 0x8, scoped, tag = 'scoped memory for tpu_custom_call.1']
    #allocation5 [shape = 's32[2]{0}', space=sflag, size = 0x8, scoped, tag = 'scoped memory for tpu_custom_call.1']
    #allocation6 [shape = 'u8[65536]{0}', space=vmem, size = 0x10000, scoped, tag = 'input window, operand 1, single buffered']
    #allocation7 [shape = 's32[1]{0}', space=sflag, size = 0x4, scoped, tag = 'scoped memory for tpu_custom_call.1']
    #allocation8 [shape = 'u8[65536]{0}', space=vmem, size = 0x10000, scoped, tag = 'input window, operand 3, single buffered']
    #allocation9 [shape = 'u8[8192]{0}', space=vmem, size = 0x2000, scoped, tag = 'output window, operand 0']
    %10 = vsyncpa [#allocation4], 0
    %s11 = scalar_lea.sflag [#allocation4], 1
    %12 = vsyncpa %s11, 0
    %13 = vsyncpa [#allocation7], 0
    %14 = vsyncpa [#allocation5], 0
    %s15 = scalar_lea.sflag [#allocation5], 1
    %16 = vsyncpa %s15, 0
    loop: start=0, step=1, limit=4
    $region2: #{tpu_custom_call.1} parent=1 // loop_pre_header
      _
    $region3: #{tpu_custom_call.1} parent=1 // loop_header
      %s18 = sphi 0, %s22
      %p19 = scmp.ge.s32.totalorder %s18, 4
      %s25 = sphi 0, %s37
      %s26 = sphi 0, %s33
      %s27 = sphi 0, %s25
      %s28 = sphi 0, %s26
      %s29 = sphi 0, %s27
      %s30 = sphi 0, %s28
      %s40 = sphi 0, %s42
      %s43 = sphi 0, %s40
      %s44 = sphi 0, %s43
      %s60 = sphi 0, %s44
      %s66 = sphi 0, %s68
      %s69 = sphi 0, %s66
      %s70 = sphi 0, %s69
      %s86 = sphi 0, %s70
      %s90 = sphi 0, %s90
      %s92 = sphi 0, %s90
      %s93 = sphi 0, %s92
      %s107 = sphi 0, %s93
      %s113 = sphi 0, %s115
      %s116 = sphi 0, %s113
      %s117 = sphi 0, %s116
      %s133 = sphi 0, %s117
      %s137 = sphi 0, %s137
      %s139 = sphi 0, %s137
      %s140 = sphi 0, %s139
      %s154 = sphi 0, %s140
      %s160 = sphi 0, %s162
      %s163 = sphi 0, %s160
      %s164 = sphi 0, %s163
      %s180 = sphi 0, %s164
    $region4: #{tpu_custom_call.1} parent=1 // loop_header_branch
      %21 = sbr.rel (%p19) target = $region8
    $region5: #{tpu_custom_call.1} parent=1 // loop_body
      %s23 = ssub.s32 %s18, 1
      %s24 = ssub.s32 %s18, 2
      %s31 = sadd.s32 1, %s26
      %p32 = scmp.ge.s32.totalorder %s31, 1
      %s33 = scalar_select %p32, 0, %s31
      %s34 = sadd.s32 1, %s25
      %s35 = scalar_select %p32, %s34, %s25
      %p36 = scmp.ge.s32.totalorder %s35, 2
      %s37 = scalar_select %p36, 0, %s35
      %s38 = ssub.s32 %s25, %s37
      %p39 = scmp.eq.s32.totalorder %s38, 0
      %s41 = sadd.s32 %s40, 1
      %s42 = scalar_select %p39, %s40, %s41
      %p45 = pneg %p39
      %p46 = scmp.eq.s32.totalorder %s18, 1
      %p47 = por %p45, %p46
      %p48 = scmp.ne.s32.totalorder %s40, %s43
      %p49 = scmp.eq.s32.totalorder %s18, 0
      %p50 = por %p48, %p49
      %p51 = scmp.ne.s32.totalorder %s40, %s43
      %p52 = scmp.eq.s32.totalorder %s23, 1
      %p53 = por %p51, %p52
      %p54 = scmp.ne.s32.totalorder %s43, %s44
      %p55 = scmp.eq.s32.totalorder %s23, 0
      %p56 = por %p54, %p55
      %p57 = scmp.ne.s32.totalorder %s43, %s44
      %p58 = scmp.eq.s32.totalorder %s24, 1
      %p59 = por %p57, %p58
      %p61 = scmp.ne.s32.totalorder %s44, %s60
      %p62 = scmp.eq.s32.totalorder %s24, 0
      %p63 = por %p61, %p62
      %s64 = ssub.s32 %s26, %s33
      %p65 = scmp.eq.s32.totalorder %s64, 0
      %s67 = sadd.s32 %s66, 1
      %s68 = scalar_select %p65, %s66, %s67
      %p71 = pneg %p65
      %p72 = scmp.eq.s32.totalorder %s18, 1
      %p73 = por %p71, %p72
      %p74 = scmp.ne.s32.totalorder %s66, %s69
      %p75 = scmp.eq.s32.totalorder %s18, 0
      %p76 = por %p74, %p75
      %p77 = scmp.ne.s32.totalorder %s66, %s69
      %p78 = scmp.eq.s32.totalorder %s23, 1
      %p79 = por %p77, %p78
      %p80 = scmp.ne.s32.totalorder %s69, %s70
      %p81 = scmp.eq.s32.totalorder %s23, 0
      %p82 = por %p80, %p81
      %p83 = scmp.ne.s32.totalorder %s69, %s70
      %p84 = scmp.eq.s32.totalorder %s24, 1
      %p85 = por %p83, %p84
      %p87 = scmp.ne.s32.totalorder %s70, %s86
      %p88 = scmp.eq.s32.totalorder %s24, 0
      %p89 = por %p87, %p88
      %s91 = sadd.s32 %s90, 1
      %p94 = scmp.eq.s32.totalorder %s18, 1
      %p95 = scmp.ne.s32.totalorder %s90, %s92
      %p96 = scmp.eq.s32.totalorder %s18, 0
      %p97 = por %p95, %p96
      %p98 = scmp.ne.s32.totalorder %s90, %s92
      %p99 = scmp.eq.s32.totalorder %s23, 1
      %p100 = por %p98, %p99
      %p101 = scmp.ne.s32.totalorder %s92, %s93
      %p102 = scmp.eq.s32.totalorder %s23, 0
      %p103 = por %p101, %p102
      %p104 = scmp.ne.s32.totalorder %s92, %s93
      %p105 = scmp.eq.s32.totalorder %s24, 1
      %p106 = por %p104, %p105
      %p108 = scmp.ne.s32.totalorder %s93, %s107
      %p109 = scmp.eq.s32.totalorder %s24, 0
      %p110 = por %p108, %p109
      %s111 = ssub.s32 %s26, %s33
      %p112 = scmp.eq.s32.totalorder %s111, 0
      %s114 = sadd.s32 %s113, 1
      %s115 = scalar_select %p112, %s113, %s114
      %p118 = pneg %p112
      %p119 = scmp.eq.s32.totalorder %s18, 1
      %p120 = por %p118, %p119
      %p121 = scmp.ne.s32.totalorder %s113, %s116
      %p122 = scmp.eq.s32.totalorder %s18, 0
      %p123 = por %p121, %p122
      %p124 = scmp.ne.s32.totalorder %s113, %s116
      %p125 = scmp.eq.s32.totalorder %s23, 1
      %p126 = por %p124, %p125
      %p127 = scmp.ne.s32.totalorder %s116, %s117
      %p128 = scmp.eq.s32.totalorder %s23, 0
      %p129 = por %p127, %p128
      %p130 = scmp.ne.s32.totalorder %s116, %s117
      %p131 = scmp.eq.s32.totalorder %s24, 1
      %p132 = por %p130, %p131
      %p134 = scmp.ne.s32.totalorder %s117, %s133
      %p135 = scmp.eq.s32.totalorder %s24, 0
      %p136 = por %p134, %p135
      %s138 = sadd.s32 %s137, 1
      %p141 = scmp.eq.s32.totalorder %s18, 1
      %p142 = scmp.ne.s32.totalorder %s137, %s139
      %p143 = scmp.eq.s32.totalorder %s18, 0
      %p144 = por %p142, %p143
      %p145 = scmp.ne.s32.totalorder %s137, %s139
      %p146 = scmp.eq.s32.totalorder %s23, 1
      %p147 = por %p145, %p146
      %p148 = scmp.ne.s32.totalorder %s139, %s140
      %p149 = scmp.eq.s32.totalorder %s23, 0
      %p150 = por %p148, %p149
      %p151 = scmp.ne.s32.totalorder %s139, %s140
      %p152 = scmp.eq.s32.totalorder %s24, 1
      %p153 = por %p151, %p152
      %p155 = scmp.ne.s32.totalorder %s140, %s154
      %p156 = scmp.eq.s32.totalorder %s24, 0
      %p157 = por %p155, %p156
      %s158 = ssub.s32 %s25, %s37
      %p159 = scmp.eq.s32.totalorder %s158, 0
      %s161 = sadd.s32 %s160, 1
      %s162 = scalar_select %p159, %s160, %s161
      %p165 = pneg %p159
      %p166 = scmp.eq.s32.totalorder %s18, 1
      %p167 = por %p165, %p166
      %p168 = scmp.ne.s32.totalorder %s160, %s163
      %p169 = scmp.eq.s32.totalorder %s18, 0
      %p170 = por %p168, %p169
      %p171 = scmp.ne.s32.totalorder %s160, %s163
      %p172 = scmp.eq.s32.totalorder %s23, 1
      %p173 = por %p171, %p172
      %p174 = scmp.ne.s32.totalorder %s163, %s164
      %p175 = scmp.eq.s32.totalorder %s23, 0
      %p176 = por %p174, %p175
      %p177 = scmp.ne.s32.totalorder %s163, %s164
      %p178 = scmp.eq.s32.totalorder %s24, 1
      %p179 = por %p177, %p178
      %p181 = scmp.ne.s32.totalorder %s164, %s180
      %p182 = scmp.eq.s32.totalorder %s24, 0
      %p183 = por %p181, %p182
      %p184 = scmp.le.s32.totalorder 1, %s18
      %p185 = scmp.lt.s32.totalorder %s18, 3
      %p186 = pnand %p184, %p185
      %p187 = pneg %p186
      // Predicated region
      $region9: #{tpu_custom_call.1} parent=5 // pred_check
        _
      $region10: #{tpu_custom_call.1} parent=5 // pred_check_branch
        %189 = sbr.rel (%p186) target = $region12
      $region11: #{tpu_custom_call.1} parent=5 // pred_region
        %s190 = ssub.s32 %s18, 1
        // Predicated region
        $region13: #{tpu_custom_call.1} parent=11 // pred_check
          %p191 = pneg %p82
        $region14: #{tpu_custom_call.1} parent=11 // pred_check_branch
          %193 = sbr.rel (%p191) target = $region16
        $region15: #{tpu_custom_call.1} parent=11 // pred_region
          %195 = vsyncadd [#allocation7], 0
          %s196 = smul.addr %s28, 8
          %s197 = scalar_lea.hbm %s1, %s196
          %s198 = sshll.u32 %s197, 4
          %s199 = int_to_ptr.hbm [resolvable:$true] %s198
          %s200 = sshll.u32 [#allocation6], 4
          %s201 = int_to_ptr.vmem [resolvable:$true] %s200
          %206 = dma.hbm_to_vmem [thread:$0]  %s199, 2048, %s201, [#allocation7], 128, 128, 8
        $region16: #{tpu_custom_call.1} parent=11 // pred_fallthru
          _
        // Predicated region
        $region17: #{tpu_custom_call.1} parent=11 // pred_check
          %p207 = pneg %p103
        $region18: #{tpu_custom_call.1} parent=11 // pred_check_branch
          %209 = sbr.rel (%p207) target = $region20
        $region19: #{tpu_custom_call.1} parent=11 // pred_region
          _
        $region20: #{tpu_custom_call.1} parent=11 // pred_fallthru
          _
        // Predicated region
        $region21: #{tpu_custom_call.1} parent=11 // pred_check
          %p210 = pneg %p129
        $region22: #{tpu_custom_call.1} parent=11 // pred_check_branch
          %212 = sbr.rel (%p210) target = $region24
        $region23: #{tpu_custom_call.1} parent=11 // pred_region
          %s213 = smul.u32 16, %s28
          %215 = vsyncadd [#allocation7], 0
          %s216 = smul.addr %s213, 8
          %s217 = scalar_lea.hbm %s3, %s216
          %s218 = sshll.u32 %s217, 4
          %s219 = int_to_ptr.hbm [resolvable:$true] %s218
          %s220 = sshll.u32 [#allocation8], 4
          %s221 = int_to_ptr.vmem [resolvable:$true] %s220
          %226 = dma.hbm_to_vmem [thread:$0]  %s219, 2048, %s221, [#allocation7], 128, 128, 8
        $region24: #{tpu_custom_call.1} parent=11 // pred_fallthru
          _
        // Predicated region
        $region25: #{tpu_custom_call.1} parent=11 // pred_check
          %p227 = pneg %p150
        $region26: #{tpu_custom_call.1} parent=11 // pred_check_branch
          %229 = sbr.rel (%p227) target = $region28
        $region27: #{tpu_custom_call.1} parent=11 // pred_region
          _
        $region28: #{tpu_custom_call.1} parent=11 // pred_fallthru
          _
      $region12: #{tpu_custom_call.1} parent=5 // pred_fallthru
        _
      %p230 = scmp.lt.s32.totalorder %s18, 2
      // Predicated region
      $region29: #{tpu_custom_call.1} parent=5 // pred_check
        %p231 = pneg %p230
      $region30: #{tpu_custom_call.1} parent=5 // pred_check_branch
        %233 = sbr.rel (%p231) target = $region32
      $region31: #{tpu_custom_call.1} parent=5 // pred_region
        // Predicated region
        $region33: #{tpu_custom_call.1} parent=31 // pred_check
          %p234 = pneg %p50
        $region34: #{tpu_custom_call.1} parent=31 // pred_check_branch
          %236 = sbr.rel (%p234) target = $region36
        $region35: #{tpu_custom_call.1} parent=31 // pred_region
          %s237 = sand.u32 %s40, 1
          %s238 = scalar_lea.sflag [#allocation4], %s237
          %s239 = sand.u32 %s40, 1
          %s240 = smul.addr %s239, 8
          %s241 = scalar_lea.vmem [#allocation3], %s240
          %243 = vsyncadd %s238, 0
          %s244 = smul.addr %s25, 8
          %s245 = scalar_lea.hbm %s0, %s244
          %s247 = sshll.u32 %s245, 4
          %s248 = int_to_ptr.hbm [resolvable:$true] %s247
          %s249 = sshll.u32 %s241, 4
          %s250 = int_to_ptr.vmem [resolvable:$true] %s249
          %252 = dma.hbm_to_vmem [thread:$0]  %s248, 128, %s250, %s238
        $region36: #{tpu_custom_call.1} parent=31 // pred_fallthru
          _
      $region32: #{tpu_custom_call.1} parent=5 // pred_fallthru
        _
      %p253 = scmp.le.s32.totalorder 1, %s18
      %p254 = scmp.lt.s32.totalorder %s18, 3
      %p255 = pnand %p253, %p254
      %p256 = pneg %p255
      // Predicated region
      $region37: #{tpu_custom_call.1} parent=5 // pred_check
        _
      $region38: #{tpu_custom_call.1} parent=5 // pred_check_branch
        %258 = sbr.rel (%p255) target = $region40
      $region39: #{tpu_custom_call.1} parent=5 // pred_region
        %s259 = ssub.s32 %s18, 1
        %s260 = sand.u32 %s43, 1
        %s261 = scalar_lea.sflag [#allocation4], %s260
        %s262 = sand.u32 %s43, 1
        %s263 = smul.addr %s262, 8
        %s264 = scalar_lea.vmem [#allocation3], %s263
        // Predicated region
        $region41: #{tpu_custom_call.1} parent=39 // pred_check
          %p265 = pneg %p56
        $region42: #{tpu_custom_call.1} parent=39 // pred_check_branch
          %267 = sbr.rel (%p265) target = $region44
        $region43: #{tpu_custom_call.1} parent=39 // pred_region
          %269 = dma.done %s261, 128
        $region44: #{tpu_custom_call.1} parent=39 // pred_fallthru
          _
        // Predicated region
        $region45: #{tpu_custom_call.1} parent=39 // pred_check
          %p270 = pneg %p82
        $region46: #{tpu_custom_call.1} parent=39 // pred_check_branch
          %272 = sbr.rel (%p270) target = $region48
        $region47: #{tpu_custom_call.1} parent=39 // pred_region
          %274 = dma.done [#allocation7], 2048
        $region48: #{tpu_custom_call.1} parent=39 // pred_fallthru
          _
        // Predicated region
        $region49: #{tpu_custom_call.1} parent=39 // pred_check
          %p275 = pneg %p129
        $region50: #{tpu_custom_call.1} parent=39 // pred_check_branch
          %277 = sbr.rel (%p275) target = $region52
        $region51: #{tpu_custom_call.1} parent=39 // pred_region
          %279 = dma.done [#allocation7], 2048
        $region52: #{tpu_custom_call.1} parent=39 // pred_fallthru
          _
        %s280 = sand.u32 %s43, 1
        %s281 = scalar_lea.sflag [#allocation4], %s280
        %s282 = sand.u32 %s43, 1
        %s283 = smul.addr %s282, 8
        %s284 = scalar_lea.vmem [#allocation3], %s283
        %p285 = pneg %p56
        %p286 = pneg %p53
        %p287 = pneg %p82
        %p288 = pneg %p79
        %p289 = pneg %p103
        %p290 = pneg %p100
        %p291 = pneg %p129
        %p292 = pneg %p126
        %p293 = pneg %p150
        %p294 = pneg %p147
        %p295 = pneg %p176
        %p296 = pneg %p173
        %s297 = sand.u32 %s163, 1
        %s298 = scalar_lea.sflag [#allocation5], %s297
        %s299 = sand.u32 %s163, 1
        %s300 = smul.addr %s299, 8
        %s301 = scalar_lea.vmem [#allocation9], %s300
        %s302 = smul.u32 16, %s28
        %p303 = scmp.eq.s32.totalorder %s28, 0
        // Predicated region
        $region53: #{tpu_custom_call.1} parent=39 // pred_check
          %p304 = pneg %p303
        $region54: #{tpu_custom_call.1} parent=39 // pred_check_branch
          %306 = sbr.rel (%p304) target = $region56
        $region55: #{tpu_custom_call.1} parent=39 // pred_region
          %307 = vst [vmem:[#allocation2] sm:$0xff] 0.0
        $region56: #{tpu_custom_call.1} parent=39 // pred_fallthru
          _
        %v308 = vld [vmem:[%s264] sm:$0xff]
        %v309 = vld [vmem:[#allocation6] sm:$0xff]
        %v310 = vld [vmem:[#allocation6 + $0x8] sm:$0xff]
        %v311 = vld [vmem:[#allocation6 + $0x10] sm:$0xff]
        %v312 = vld [vmem:[#allocation6 + $0x18] sm:$0xff]
        %v313 = vld [vmem:[#allocation6 + $0x20] sm:$0xff]
        %v314 = vld [vmem:[#allocation6 + $0x28] sm:$0xff]
        %v315 = vld [vmem:[#allocation6 + $0x30] sm:$0xff]
        %v316 = vld [vmem:[#allocation6 + $0x38] sm:$0xff]
        %v317 = vld [vmem:[#allocation6 + $0x40] sm:$0xff]
        %v318 = vld [vmem:[#allocation6 + $0x48] sm:$0xff]
        %v319 = vld [vmem:[#allocation6 + $0x50] sm:$0xff]
        %v320 = vld [vmem:[#allocation6 + $0x58] sm:$0xff]
        %v321 = vld [vmem:[#allocation6 + $0x60] sm:$0xff]
        %v322 = vld [vmem:[#allocation6 + $0x68] sm:$0xff]
        %v323 = vld [vmem:[#allocation6 + $0x70] sm:$0xff]
        %v324 = vld [vmem:[#allocation6 + $0x78] sm:$0xff]
        %s325 = smul.u32 %s28, 128
        %s326 = sshra.s32 %s325, 7
        %s327 = sand.u32 %s325, 127
        %s328 = scalar_lea.vmem %s2, %s326
        %v329 = vld [vmem:[%s328] sm:$0x1]
        %v331 = vperm.slane %v329, 0
        %333 = vmatpush.msra.mxu0 %v324
        %334 = vmatpush.msra.mxu0 %v323
        %335 = vmatpush.msra.mxu0 %v322
        %336 = vmatpush.msra.mxu0 %v321
        %337 = vmatpush.msra.mxu0 %v320
        %338 = vmatpush.msra.mxu0 %v319
        %339 = vmatpush.msra.mxu0 %v318
        %340 = vmatpush.msra.mxu0 %v317
        %341 = vmatpush.msra.mxu0 %v316
        %342 = vmatpush.msra.mxu0 %v315
        %343 = vmatpush.msra.mxu0 %v314
        %344 = vmatpush.msra.mxu0 %v313
        %345 = vmatpush.msra.mxu0 %v312
        %346 = vmatpush.msra.mxu0 %v311
        %347 = vmatpush.msra.mxu0 %v310
        %348 = vmatpush.msra.mxu0 %v309
        %349 = vmatmul.f32.gmra.mxu0 %v308
        %v350 = vpop.f32.mrf.mxu0
        %v351 = vadd.f32 %v331, %v350
        %352 = vdwg.mxu0
        %v353 = vmul.f32 %v351, 0.5
        %v354 = vmul.f32 %v351, 0.70710677
        %v355 = vmul.f32 %v354, %v354
        %v356 = vmin.f32 16.0, %v355
        %v357 = vmul.f32 %v356, 2.1237322e-06
        %v358 = vadd.f32 %v357, 0.00028619796
        %v359 = vmul.f32 %v356, %v358
        %v360 = vadd.f32 %v359, 0.0036580483
        %v361 = vmul.f32 %v356, %v360
        %v362 = vadd.f32 %v361, 0.05243302
        %v363 = vmul.f32 %v356, %v362
        %v364 = vadd.f32 %v363, 0.18741608
        %v365 = vmul.f32 %v356, %v364
        %v366 = vadd.f32 %v365, 1.1283791
        %v367 = vmul.f32 %v354, %v366
        %v368 = vmul.f32 %v356, 3.8918573e-05
        %v369 = vadd.f32 %v368, 0.001143296
        %v370 = vmul.f32 %v356, %v369
        %v371 = vadd.f32 %v370, 0.014752088
        %v372 = vmul.f32 %v356, %v371
        %v373 = vadd.f32 %v372, 0.112945676
        %v374 = vmul.f32 %v356, %v373
        %v375 = vadd.f32 %v374, 0.4994258
        %v376 = vmul.f32 %v356, %v375
        %v377 = vadd.f32 %v376, 1.0
        %v378 = vrcp.pop %v377
        %v379 = vmul.f32 %v377, %v378
        %v380 = vsub.f32 1.0, %v379
        %v381 = vmul.f32 %v378, %v380
        %v382 = vadd.f32 %v378, %v381
        %vm383 = vweird.f32 %v377
        %vm384 = vweird.f32 %v378
        %vm385 = vmor %vm383, %vm384
        %v386 = vsel %vm385, %v378, %v382
        %v387 = vand.u32 2147483647, %v377
        %vm388 = vcmp.eq.f32.partialorder %v387, 8.507059e+37
        %v389 = vand.u32 %v377, 2147483648
        %v390 = vor.u32 1.1754944e-38, %v389
        %v391 = vsel %vm388, %v390, %v386
        %v392 = vmul.f32 %v367, %v391
        %v393 = vmin.f32 %v392, 1.0
        %v394 = vmax.f32 %v393, -1.0
        %v395 = vadd.f32 %v394, 1.0
        %v396 = vmul.f32 %v353, %v395
        %v397 = vld [vmem:[#allocation2] sm:$0xff]
        %v398 = vld [vmem:[#allocation8] sm:$0xff]
        %v399 = vld [vmem:[#allocation8 + $0x8] sm:$0xff]
        %v400 = vld [vmem:[#allocation8 + $0x10] sm:$0xff]
        %v401 = vld [vmem:[#allocation8 + $0x18] sm:$0xff]
        %v402 = vld [vmem:[#allocation8 + $0x20] sm:$0xff]
        %v403 = vld [vmem:[#allocation8 + $0x28] sm:$0xff]
        %v404 = vld [vmem:[#allocation8 + $0x30] sm:$0xff]
        %v405 = vld [vmem:[#allocation8 + $0x38] sm:$0xff]
        %v406 = vld [vmem:[#allocation8 + $0x40] sm:$0xff]
        %v407 = vld [vmem:[#allocation8 + $0x48] sm:$0xff]
        %v408 = vld [vmem:[#allocation8 + $0x50] sm:$0xff]
        %v409 = vld [vmem:[#allocation8 + $0x58] sm:$0xff]
        %v410 = vld [vmem:[#allocation8 + $0x60] sm:$0xff]
        %v411 = vld [vmem:[#allocation8 + $0x68] sm:$0xff]
        %v412 = vld [vmem:[#allocation8 + $0x70] sm:$0xff]
        %v413 = vld [vmem:[#allocation8 + $0x78] sm:$0xff]
        %414 = vmatpush.msra.mxu0 %v413
        %415 = vmatpush.msra.mxu0 %v412
        %416 = vmatpush.msra.mxu0 %v411
        %417 = vmatpush.msra.mxu0 %v410
        %418 = vmatpush.msra.mxu0 %v409
        %419 = vmatpush.msra.mxu0 %v408
        %420 = vmatpush.msra.mxu0 %v407
        %421 = vmatpush.msra.mxu0 %v406
        %422 = vmatpush.msra.mxu0 %v405
        %423 = vmatpush.msra.mxu0 %v404
        %424 = vmatpush.msra.mxu0 %v403
        %425 = vmatpush.msra.mxu0 %v402
        %426 = vmatpush.msra.mxu0 %v401
        %427 = vmatpush.msra.mxu0 %v400
        %428 = vmatpush.msra.mxu0 %v399
        %429 = vmatpush.msra.mxu0 %v398
        %430 = vmatmul.f32.gmra.mxu0 %v396
        %v431 = vpop.f32.mrf.mxu0
        %v432 = vadd.f32 0.0, %v431
        %433 = vdwg.mxu0
        %v434 = vadd.f32 %v397, %v432
        %435 = vst [vmem:[#allocation2] sm:$0xff] %v434
        // Predicated region
        $region57: #{tpu_custom_call.1} parent=39 // pred_check
          %p436 = pneg %p303
        $region58: #{tpu_custom_call.1} parent=39 // pred_check_branch
          %438 = sbr.rel (%p436) target = $region60
        $region59: #{tpu_custom_call.1} parent=39 // pred_region
          %v439 = vld [vmem:[#allocation2] sm:$0xff]
          %v440 = vld [vmem:[%s4] sm:$0x1]
          %v442 = vperm.slane %v440, 0
          %v444 = vadd.f32 %v439, %v442
          %445 = vst [vmem:[%s301] sm:$0xff] %v444
        $region60: #{tpu_custom_call.1} parent=39 // pred_fallthru
          _
        %s446 = sand.u32 %s163, 1
        %s447 = scalar_lea.sflag [#allocation5], %s446
        %s448 = sand.u32 %s163, 1
        %s449 = smul.addr %s448, 8
        %s450 = scalar_lea.vmem [#allocation9], %s449
        // Predicated region
        $region61: #{tpu_custom_call.1} parent=39 // pred_check
          %p451 = pneg %p173
        $region62: #{tpu_custom_call.1} parent=39 // pred_check_branch
          %453 = sbr.rel (%p451) target = $region64
        $region63: #{tpu_custom_call.1} parent=39 // pred_region
          %455 = vsyncadd %s447, 0
          %s456 = smul.addr %s27, 8
          %s457 = scalar_lea.hbm %s5, %s456
          %s459 = sshll.u32 %s450, 4
          %s460 = int_to_ptr.vmem [resolvable:$true] %s459
          %s461 = sshll.u32 %s457, 4
          %s462 = int_to_ptr.hbm [resolvable:$true] %s461
          %464 = dma.vmem_to_hbm [thread:$0]  %s460, 128, %s462, %s447
        $region64: #{tpu_custom_call.1} parent=39 // pred_fallthru
          _
      $region40: #{tpu_custom_call.1} parent=5 // pred_fallthru
        _
      %p465 = scmp.le.s32.totalorder 2, %s18
      // Predicated region
      $region65: #{tpu_custom_call.1} parent=5 // pred_check
        %p466 = pneg %p465
      $region66: #{tpu_custom_call.1} parent=5 // pred_check_branch
        %468 = sbr.rel (%p466) target = $region68
      $region67: #{tpu_custom_call.1} parent=5 // pred_region
        %s469 = ssub.s32 %s18, 2
        // Predicated region
        $region69: #{tpu_custom_call.1} parent=67 // pred_check
          %p470 = pneg %p179
        $region70: #{tpu_custom_call.1} parent=67 // pred_check_branch
          %472 = sbr.rel (%p470) target = $region72
        $region71: #{tpu_custom_call.1} parent=67 // pred_region
          %s473 = sand.u32 %s164, 1
          %s474 = scalar_lea.sflag [#allocation5], %s473
          %s475 = sand.u32 %s164, 1
          %s476 = smul.addr %s475, 8
          %s477 = scalar_lea.vmem [#allocation9], %s476
          %479 = dma.done %s474, 128
        $region72: #{tpu_custom_call.1} parent=67 // pred_fallthru
          _
      $region68: #{tpu_custom_call.1} parent=5 // pred_fallthru
        _
    $region6: #{tpu_custom_call.1} parent=1 // loop_footer
      %s22 = sadd.s32 1, %s18
    $region7: #{tpu_custom_call.1} parent=1 // loop_footer_branch
      %17 = sbr.rel target = $region3
    $region8: #{tpu_custom_call.1} parent=1 // loop_exit
      _
    %480 = vsyncpa [#allocation4], 1
    %s481 = scalar_lea.sflag [#allocation4], 1
    %482 = vsyncpa %s481, 1
    %483 = vsyncpa [#allocation7], 1
    %484 = vsyncpa [#allocation5], 1
    %s485 = scalar_lea.sflag [#allocation5], 1
    %486 = vsyncpa %s485, 1

</llo_original>
